<compile_context>
chip_gen: v7x
topology: tpu7x:2x2x1
jax: 0.10.0
libtpu: 0.0.40
codegen_flags: <defaults>
</compile_context>

<pallas_src>
import functools

import jax
import jax.numpy as jnp
from jax.experimental import pallas as pl
from jax.experimental.pallas import tpu as pltpu

_LANE = 128


def _util_loss_kernel(n_rows, tiles_per_core,
                      logits_ref, targets_ref, out_ref):
    cidx = pl.program_id(0)   # core-split axis ("parallel": 2 TCs on v7x)
    i = pl.program_id(1)      # row-tile reduction axis ("arbitrary")

    @pl.when(i == 0)
    def _init():
        out_ref[...] = jnp.zeros_like(out_ref)

    # Upcast after the DMA: bf16 ingest halves HBM bytes, math stays f32.
    logits = logits_ref[...].astype(jnp.float32)          # (tile_n, C)
    tgt = targets_ref[...]                                 # (tile_n, 1) int32
    tn, nclass = logits.shape

    # Numerically stable log-sum-exp over the class (lane) axis.
    m = jnp.max(logits, axis=-1, keepdims=True)            # (tile_n, 1)
    lse = jnp.log(jnp.sum(jnp.exp(logits - m), axis=-1, keepdims=True)) + m

    # Target logit via a (1, C) lane-iota one-hot select (no dynamic gather on
    # TPU).  nll = lse - target_logit avoids materializing full log_probs.
    col = jax.lax.broadcasted_iota(jnp.int32, (1, nclass), 1)
    target_logit = jnp.sum(jnp.where(col == tgt, logits, 0.0),
                           axis=-1, keepdims=True)          # (tile_n, 1)
    nll = lse - target_logit                                 # (tile_n, 1)

    # Global first row of this tile (unclamped, so padded tiles mask to 0).
    tile_start = (cidx * tiles_per_core + i) * tn
    is_full = tile_start + tn <= n_rows

    @pl.when(is_full)
    def _accumulate_full():        # hot path: no row iota / mask work
        out_ref[0:1, 0:1] += jnp.sum(nll, keepdims=True)

    @pl.when(jnp.logical_not(is_full))
    def _accumulate_tail():        # only the partial / fully-padded tiles
        row = jax.lax.broadcasted_iota(jnp.int32, (tn, 1), 0) + tile_start
        masked = jnp.where(row < n_rows, nll, 0.0)
        out_ref[0:1, 0:1] += jnp.sum(masked, keepdims=True)


def _pick_tile_n(n, num_classes, sublane):
    # Per-row VMEM footprint of one input-buffer set, counting (8,128) tile
    # padding.  Logits are budgeted at f32 width so in-kernel f32 temporaries
    # have headroom even with bf16 ingest; the (tile_n,1) int32 targets block
    # is lane-padded to 128.
    logits_row = ((num_classes + _LANE - 1) // _LANE) * _LANE * 4
    targets_row = _LANE * 4
    row_bytes = logits_row + targets_row
    # ~10 MiB per set -> ~20 MiB of double-buffered inputs, comfortably inside
    # the 40 MiB scoped-VMEM limit on v5e/v6e/v7x with room for temporaries.
    budget = 10 * 1024 * 1024
    rows = max(sublane, (budget // row_bytes) // sublane * sublane)
    return rows if rows < n else n


def util_loss(logits, targets, latency, util, *, lat_coef, util_coef, tile_n=None):
    """Pallas equivalent of UtilLoss.forward.

    logits : (N, C) float32 or bfloat16
    targets: (N,)   int class indices (ignore_index not supported)
    latency, util: scalars
    Returns a scalar float32 loss: mean cross-entropy + lat_coef*latency
    - util_coef*util.
    """
    n, num_classes = logits.shape
    elem_bytes = jnp.dtype(logits.dtype).itemsize
    # Native sublane packing: 8 rows for f32, 16 for bf16.
    sublane = max(1, (8 * 4) // elem_bytes)

    if tile_n is None:
        tile_n = _pick_tile_n(n, num_classes, sublane)
    tile_n = int(tile_n)
    if tile_n < n:
        # Second-minor block dim must be a multiple of the sublane packing
        # (unless the block spans the full row extent).
        tile_n = max(sublane, (tile_n // sublane) * sublane)
    else:
        tile_n = n

    num_tiles = (n + tile_n - 1) // tile_n
    # v7x has 2 TensorCores; the leading "parallel" axis lets each core reduce
    # its own half of the row tiles.  Harmless (serial) on 1-TC v5e/v6e.
    num_splits = 2 if num_tiles >= 2 else 1
    tiles_per_core = (num_tiles + num_splits - 1) // num_splits

    targets2d = targets.astype(jnp.int32).reshape(n, 1)

    def block_map(cidx, i):
        t = cidx * tiles_per_core + i
        # Clamp tiles past the end of the array (core-split padding); their
        # rows are fully masked out inside the kernel.
        return (jnp.minimum(t, num_tiles - 1), 0)

    kernel = functools.partial(_util_loss_kernel, int(n), int(tiles_per_core))

    partials = pl.pallas_call(
        kernel,
        out_shape=jax.ShapeDtypeStruct((num_splits * 8, 128), jnp.float32),
        grid=(num_splits, tiles_per_core),
        in_specs=[
            pl.BlockSpec((tile_n, num_classes), block_map),   # logits tile
            pl.BlockSpec((tile_n, 1), block_map),             # targets tile
        ],
        # One resident (8,128) accumulator block per core split.
        out_specs=pl.BlockSpec((8, 128), lambda cidx, i: (cidx, 0)),
        compiler_params=pltpu.CompilerParams(
            dimension_semantics=("parallel", "arbitrary"),
            vmem_limit_bytes=40 * 1024 * 1024,
        ),
    )(logits, targets2d)

    # Finalize in the wrapper: sum per-core partial CE sums, mean over the
    # GLOBAL N, then the latency / utilization terms.
    ce_mean = jnp.sum(partials) / jnp.float32(n)
    loss = (ce_mean
            + jnp.float32(lat_coef) * jnp.asarray(latency, jnp.float32)
            - jnp.float32(util_coef) * jnp.asarray(util, jnp.float32))
    return loss


def _reference(logits, targets, latency, util, lat_coef, util_coef):
    lp = jax.nn.log_softmax(logits.astype(jnp.float32), axis=-1)
    nll = -jnp.take_along_axis(lp, targets[:, None].astype(jnp.int32), axis=-1)[:, 0]
    return jnp.mean(nll) + lat_coef * latency - util_coef * util


if __name__ == "__main__":
    key = jax.random.PRNGKey(0)
    k1, k2, k3, k4, k5, k6 = jax.random.split(key, 6)

    N, C = 20, 32                       # small demo shapes
    lat_coef, util_coef = 0.1, 0.05

    logits = jax.random.normal(k1, (N, C), dtype=jnp.float32)
    targets = jax.random.randint(k2, (N,), 0, C, dtype=jnp.int32)
    latency = jnp.float32(jax.random.uniform(k3, ()))
    util = jnp.float32(jax.random.uniform(k4, ()))

    ref = _reference(logits, targets, latency, util, lat_coef, util_coef)

    # 1) Multi-tile, core-split path with a partial tail tile and one fully
    #    padded (clamped) tile: num_tiles=3 -> grid (2, 2).
    loss_tiled = util_loss(logits, targets, latency, util,
                           lat_coef=lat_coef, util_coef=util_coef, tile_n=8)
    loss_tiled = jax.block_until_ready(loss_tiled)
    assert not bool(jnp.isnan(loss_tiled)), "loss value is NaN"   # mirrors module assert
    assert abs(float(loss_tiled) - float(ref)) < 1e-3, (float(loss_tiled), float(ref))

    # 2) Auto tile size (single block, single split at these shapes).
    loss_auto = util_loss(logits, targets, latency, util,
                          lat_coef=lat_coef, util_coef=util_coef)
    loss_auto = jax.block_until_ready(loss_auto)
    assert abs(float(loss_auto) - float(ref)) < 1e-3, (float(loss_auto), float(ref))

    # 3) bf16 ingest (upcast to f32 inside the kernel), grid (2, 1) with a
    #    partial tile on the second core.
    logits_bf16 = logits.astype(jnp.bfloat16)
    loss_bf16 = util_loss(logits_bf16, targets, latency, util,
                          lat_coef=lat_coef, util_coef=util_coef, tile_n=16)
    loss_bf16 = jax.block_until_ready(loss_bf16)
    ref_bf16 = _reference(logits_bf16, targets, latency, util, lat_coef, util_coef)
    assert not bool(jnp.isnan(loss_bf16)), "loss value is NaN"
    assert abs(float(loss_bf16) - float(ref_bf16)) < 5e-3, (float(loss_bf16), float(ref_bf16))

    # 4) Moderate shape with C > 128 and an odd tile count:
    #    N=300, tile_n=64 -> num_tiles=5 -> grid (2, 3) with masked tail/pad.
    N2, C2 = 300, 160
    logits2 = jax.random.normal(k5, (N2, C2), dtype=jnp.float32)
    targets2 = jax.random.randint(k6, (N2,), 0, C2, dtype=jnp.int32)
    ref2 = _reference(logits2, targets2, latency, util, lat_coef, util_coef)
    loss2 = util_loss(logits2, targets2, latency, util,
                      lat_coef=lat_coef, util_coef=util_coef, tile_n=64)
    loss2 = jax.block_until_ready(loss2)
    assert not bool(jnp.isnan(loss2)), "loss value is NaN"
    assert abs(float(loss2) - float(ref2)) < 1e-3, (float(loss2), float(ref2))

    print("KERNEL_OK")
</pallas_src>

<mosaic_0001>
module attributes {stable_mosaic.version = 11 : i64} {
  func.func @_util_loss_kernel(%arg0: i32, %arg1: i32, %arg2: memref<8x32xf32, #tpu.memory_space<vmem>>, %arg3: memref<8x1xi32, #tpu.memory_space<vmem>>, %arg4: memref<8x128xf32, #tpu.memory_space<vmem>>) attributes {dimension_semantics = [#tpu.dimension_semantics<parallel>, #tpu.dimension_semantics<arbitrary>], iteration_bounds = array<i64: 2, 2>, scalar_prefetch = 0 : i64, scratch_operands = 0 : i64, tpu.core_type = #tpu.core_type<tc>, window_params = [{transform_indices = @transform_0, window_bounds = array<i64: 8, 32>}, {transform_indices = @transform_1, window_bounds = array<i64: 8, 1>}, {transform_indices = @transform_2, window_bounds = array<i64: 8, 128>}]} {
    %c0_i32 = arith.constant 0 : i32
    %0 = arith.cmpi eq, %arg1, %c0_i32 : i32
    %1 = arith.extui %0 : i1 to i32
    %c0_i32_0 = arith.constant 0 : i32
    %2 = arith.cmpi ne, %1, %c0_i32_0 : i32
    scf.if %2 {
      %cst_10 = arith.constant 0.000000e+00 : f32
      %33 = vector.broadcast %cst_10 : f32 to vector<8x128xf32>
      %c0_11 = arith.constant 0 : index
      %c0_12 = arith.constant 0 : index
      %34 = vector.load %arg4[%c0_11, %c0_12] : memref<8x128xf32, #tpu.memory_space<vmem>>, vector<8x128xf32>
      tpu.vector_store %arg4[%c0_11, %c0_12], %33 {strides = array<i32>} : memref<8x128xf32, #tpu.memory_space<vmem>>, vector<8x128xf32>,
    } else {
    }
    %c0 = arith.constant 0 : index
    %c0_1 = arith.constant 0 : index
    %3 = vector.load %arg2[%c0, %c0_1] : memref<8x32xf32, #tpu.memory_space<vmem>>, vector<8x32xf32>
    %c0_2 = arith.constant 0 : index
    %c0_3 = arith.constant 0 : index
    %4 = vector.load %arg3[%c0_2, %c0_3] : memref<8x1xi32, #tpu.memory_space<vmem>>, vector<8x1xi32>
    %cst = arith.constant dense<0xFF800000> : vector<8xf32>
    %5 = vector.multi_reduction <maximumf>, %3, %cst [1] : vector<8x32xf32> to vector<8xf32>
    %6 = vector.shape_cast %5 : vector<8xf32> to vector<8x1xf32>
    %7 = vector.broadcast %6 : vector<8x1xf32> to vector<8x32xf32>
    %8 = arith.subf %3, %7 : vector<8x32xf32>
    %9 = math.exp %8 : vector<8x32xf32>
    %cst_4 = arith.constant dense<0.000000e+00> : vector<8xf32>
    %10 = vector.multi_reduction <add>, %9, %cst_4 [1] : vector<8x32xf32> to vector<8xf32>
    %11 = vector.shape_cast %10 : vector<8xf32> to vector<8x1xf32>
    %12 = math.log %11 : vector<8x1xf32>
    %13 = arith.addf %12, %6 : vector<8x1xf32>
    %14 = tpu.iota {dimensions = array<i32: 1>} : vector<1x32xi32>
    %15 = vector.broadcast %14 : vector<1x32xi32> to vector<8x32xi32>
    %16 = vector.broadcast %4 : vector<8x1xi32> to vector<8x32xi32>
    %17 = arith.cmpi eq, %15, %16 : vector<8x32xi32>
    %cst_5 = arith.constant 0.000000e+00 : f32
    %18 = vector.broadcast %cst_5 : f32 to vector<8x32xf32>
    %19 = arith.select %17, %3, %18 : vector<8x32xi1>, vector<8x32xf32>
    %cst_6 = arith.constant dense<0.000000e+00> : vector<8xf32>
    %20 = vector.multi_reduction <add>, %19, %cst_6 [1] : vector<8x32xf32> to vector<8xf32>
    %21 = vector.shape_cast %20 : vector<8xf32> to vector<8x1xf32>
    %22 = arith.subf %13, %21 : vector<8x1xf32>
    %c2_i32 = arith.constant 2 : i32
    %23 = arith.muli %arg0, %c2_i32 : i32
    %24 = arith.addi %23, %arg1 : i32
    %c8_i32 = arith.constant 8 : i32
    %25 = arith.muli %24, %c8_i32 : i32
    %c8_i32_7 = arith.constant 8 : i32
    %26 = arith.addi %25, %c8_i32_7 : i32
    %c20_i32 = arith.constant 20 : i32
    %27 = arith.cmpi sle, %26, %c20_i32 : i32
    %28 = arith.extui %27 : i1 to i32
    %c0_i32_8 = arith.constant 0 : i32
    %29 = arith.cmpi ne, %28, %c0_i32_8 : i32
    scf.if %29 {
      %c0_10 = arith.constant 0 : index
      %c0_11 = arith.constant 0 : index
      %33 = vector.load %arg4[%c0_10, %c0_11] : memref<8x128xf32, #tpu.memory_space<vmem>>, vector<1x1xf32>
      %34 = vector.shape_cast %22 : vector<8x1xf32> to vector<1x8x1xf32>
      %cst_12 = arith.constant dense<0.000000e+00> : vector<1xf32>
      %35 = vector.multi_reduction <add>, %34, %cst_12 [1, 2] : vector<1x8x1xf32> to vector<1xf32>
      %36 = vector.shape_cast %35 : vector<1xf32> to vector<1x1x1xf32>
      %37 = vector.extract %36[0, 0, 0] : f32 from vector<1x1x1xf32>
      %38 = vector.broadcast %37 : f32 to vector<1x1xf32>
      %39 = arith.addf %33, %38 : vector<1x1xf32>
      %c0_13 = arith.constant 0 : index
      %c0_14 = arith.constant 0 : index
      %40 = vector.load %arg4[%c0_13, %c0_14] : memref<8x128xf32, #tpu.memory_space<vmem>>, vector<1x1xf32>
      tpu.vector_store %arg4[%c0_13, %c0_14], %39 {strides = array<i32>} : memref<8x128xf32, #tpu.memory_space<vmem>>, vector<1x1xf32>,
    } else {
    }
    %true = arith.constant true
    %30 = arith.xori %27, %true : i1
    %31 = arith.extui %30 : i1 to i32
    %c0_i32_9 = arith.constant 0 : i32
    %32 = arith.cmpi ne, %31, %c0_i32_9 : i32
    scf.if %32 {
      %33 = tpu.iota {dimensions = array<i32: 0>} : vector<8x1xi32>
      %34 = vector.broadcast %25 : i32 to vector<8x1xi32>
      %35 = arith.addi %33, %34 : vector<8x1xi32>
      %c20_i32_10 = arith.constant 20 : i32
      %36 = vector.broadcast %c20_i32_10 : i32 to vector<8x1xi32>
      %37 = arith.cmpi slt, %35, %36 : vector<8x1xi32>
      %cst_11 = arith.constant 0.000000e+00 : f32
      %38 = vector.broadcast %cst_11 : f32 to vector<8x1xf32>
      %39 = arith.select %37, %22, %38 : vector<8x1xi1>, vector<8x1xf32>
      %c0_12 = arith.constant 0 : index
      %c0_13 = arith.constant 0 : index
      %40 = vector.load %arg4[%c0_12, %c0_13] : memref<8x128xf32, #tpu.memory_space<vmem>>, vector<1x1xf32>
      %41 = vector.shape_cast %39 : vector<8x1xf32> to vector<1x8x1xf32>
      %cst_14 = arith.constant dense<0.000000e+00> : vector<1xf32>
      %42 = vector.multi_reduction <add>, %41, %cst_14 [1, 2] : vector<1x8x1xf32> to vector<1xf32>
      %43 = vector.shape_cast %42 : vector<1xf32> to vector<1x1x1xf32>
      %44 = vector.extract %43[0, 0, 0] : f32 from vector<1x1x1xf32>
      %45 = vector.broadcast %44 : f32 to vector<1x1xf32>
      %46 = arith.addf %40, %45 : vector<1x1xf32>
      %c0_15 = arith.constant 0 : index
      %c0_16 = arith.constant 0 : index
      %47 = vector.load %arg4[%c0_15, %c0_16] : memref<8x128xf32, #tpu.memory_space<vmem>>, vector<1x1xf32>
      tpu.vector_store %arg4[%c0_15, %c0_16], %46 {strides = array<i32>} : memref<8x128xf32, #tpu.memory_space<vmem>>, vector<1x1xf32>,
    } else {
    }
    return
  }
  func.func @transform_0(%arg0: i32, %arg1: i32) -> (i32, i32) {
    %c2_i32 = arith.constant 2 : i32
    %0 = arith.muli %arg0, %c2_i32 : i32
    %1 = arith.addi %0, %arg1 : i32
    %c2_i32_0 = arith.constant 2 : i32
    %2 = arith.minsi %1, %c2_i32_0 : i32
    %c0_i32 = arith.constant 0 : i32
    %c0_i32_1 = arith.constant 0 : i32
    return %2, %c0_i32 : i32, i32
  }
  func.func @transform_1(%arg0: i32, %arg1: i32) -> (i32, i32) {
    %c2_i32 = arith.constant 2 : i32
    %0 = arith.muli %arg0, %c2_i32 : i32
    %1 = arith.addi %0, %arg1 : i32
    %c2_i32_0 = arith.constant 2 : i32
    %2 = arith.minsi %1, %c2_i32_0 : i32
    %c0_i32 = arith.constant 0 : i32
    %c0_i32_1 = arith.constant 0 : i32
    return %2, %c0_i32 : i32, i32
  }
  func.func @transform_2(%arg0: i32, %arg1: i32) -> (i32, i32) {
    %c0_i32 = arith.constant 0 : i32
    %c0_i32_0 = arith.constant 0 : i32
    return %arg0, %c0_i32 : i32, i32
  }
}

</mosaic_0001>

<llo_original>
// kernel: tpu_custom_call.1
$region0: #{tpu_custom_call.1}
  #allocation0 [shape = 'u32[]', space=smem, size = 0x4, offset = 0x4, fixed_abs, tag = 'smem constant byte address 0x4 - core index']
  #allocation1 [shape = 'u32[144,128]{1,0:T(1,128)}', space=vmem, size = 0x12000, scoped, tag = 'internal scratch']
  %s0 = inlined_call_operand.vmem [shape: f32[20,32], index: 0, kind: input, shape index: {}]
  %s1 = inlined_call_operand.vmem [shape: s32[20,1], index: 1, kind: input, shape index: {}]
  %s2 = inlined_call_operand.hbm [shape: f32[16,128], index: 2, kind: output, shape index: {}]
  %s3 = sld [smem:[#allocation0]]
  $region53: #{tpu_custom_call.1} parent=0
    _
  %s5 = ssub.s32 1, %s3
  %s6 = scalar_select 0, %s5, %s3
  $region1: #{tpu_custom_call.1} parent=0
    #allocation2 [shape = 'u8[8192]{0}', space=vmem, size = 0x2000, scoped, tag = 'output window, operand 0']
    #allocation3 [shape = 's32[2]{0}', space=sflag, size = 0x8, scoped, tag = 'scoped memory for tpu_custom_call.1']
    %7 = vsyncpa [#allocation3], 0
    %s8 = scalar_lea.sflag [#allocation3], 1
    %9 = vsyncpa %s8, 0
    loop: start=0, step=1, limit=6
    $region2: #{tpu_custom_call.1} parent=1 // loop_pre_header
      _
    $region3: #{tpu_custom_call.1} parent=1 // loop_header
      %s11 = sphi 0, %s15
      %p12 = scmp.ge.s32.totalorder %s11, 6
      %s18 = sphi 0, %s30
      %s19 = sphi 0, %s26
      %s20 = sphi 0, %s18
      %s21 = sphi 0, %s19
      %s22 = sphi 0, %s20
      %s23 = sphi 0, %s21
      %s41 = sphi 0, %s43
      %s44 = sphi 0, %s41
      %s45 = sphi 0, %s44
      %s61 = sphi 0, %s45
      %s75 = sphi 0, %s77
      %s78 = sphi 0, %s75
      %s79 = sphi 0, %s78
      %s95 = sphi 0, %s79
      %s101 = sphi 0, %s103
      %s104 = sphi 0, %s101
      %s105 = sphi 0, %s104
      %s121 = sphi 0, %s105
    $region4: #{tpu_custom_call.1} parent=1 // loop_header_branch
      %14 = sbr.rel (%p12) target = $region8
    $region5: #{tpu_custom_call.1} parent=1 // loop_body
      %s16 = ssub.s32 %s11, 1
      %s17 = ssub.s32 %s11, 2
      %s24 = sadd.s32 1, %s19
      %p25 = scmp.ge.s32.totalorder %s24, 2
      %s26 = scalar_select %p25, 0, %s24
      %s27 = sadd.s32 1, %s18
      %s28 = scalar_select %p25, %s27, %s18
      %p29 = scmp.ge.s32.totalorder %s28, 2
      %s30 = scalar_select %p29, 0, %s28
      %s31 = smul.u32 %s18, 2
      %s32 = sadd.s32 %s31, %s19
      %p33 = scmp.lt.s32.totalorder %s32, 2
      %s34 = scalar_select %p33, %s32, 2
      %s35 = smul.u32 %s30, 2
      %s36 = sadd.s32 %s35, %s26
      %p37 = scmp.lt.s32.totalorder %s36, 2
      %s38 = scalar_select %p37, %s36, 2
      %s39 = ssub.s32 %s34, %s38
      %p40 = scmp.eq.s32.totalorder %s39, 0
      %s42 = sadd.s32 %s41, 1
      %s43 = scalar_select %p40, %s41, %s42
      %p46 = pneg %p40
      %p47 = scmp.eq.s32.totalorder %s11, 3
      %p48 = por %p46, %p47
      %p49 = scmp.ne.s32.totalorder %s41, %s44
      %p50 = scmp.eq.s32.totalorder %s11, 0
      %p51 = por %p49, %p50
      %p52 = scmp.ne.s32.totalorder %s41, %s44
      %p53 = scmp.eq.s32.totalorder %s16, 3
      %p54 = por %p52, %p53
      %p55 = scmp.ne.s32.totalorder %s44, %s45
      %p56 = scmp.eq.s32.totalorder %s16, 0
      %p57 = por %p55, %p56
      %p58 = scmp.ne.s32.totalorder %s44, %s45
      %p59 = scmp.eq.s32.totalorder %s17, 3
      %p60 = por %p58, %p59
      %p62 = scmp.ne.s32.totalorder %s45, %s61
      %p63 = scmp.eq.s32.totalorder %s17, 0
      %p64 = por %p62, %p63
      %s65 = smul.u32 %s18, 2
      %s66 = sadd.s32 %s65, %s19
      %p67 = scmp.lt.s32.totalorder %s66, 2
      %s68 = scalar_select %p67, %s66, 2
      %s69 = smul.u32 %s30, 2
      %s70 = sadd.s32 %s69, %s26
      %p71 = scmp.lt.s32.totalorder %s70, 2
      %s72 = scalar_select %p71, %s70, 2
      %s73 = ssub.s32 %s68, %s72
      %p74 = scmp.eq.s32.totalorder %s73, 0
      %s76 = sadd.s32 %s75, 1
      %s77 = scalar_select %p74, %s75, %s76
      %p80 = pneg %p74
      %p81 = scmp.eq.s32.totalorder %s11, 3
      %p82 = por %p80, %p81
      %p83 = scmp.ne.s32.totalorder %s75, %s78
      %p84 = scmp.eq.s32.totalorder %s11, 0
      %p85 = por %p83, %p84
      %p86 = scmp.ne.s32.totalorder %s75, %s78
      %p87 = scmp.eq.s32.totalorder %s16, 3
      %p88 = por %p86, %p87
      %p89 = scmp.ne.s32.totalorder %s78, %s79
      %p90 = scmp.eq.s32.totalorder %s16, 0
      %p91 = por %p89, %p90
      %p92 = scmp.ne.s32.totalorder %s78, %s79
      %p93 = scmp.eq.s32.totalorder %s17, 3
      %p94 = por %p92, %p93
      %p96 = scmp.ne.s32.totalorder %s79, %s95
      %p97 = scmp.eq.s32.totalorder %s17, 0
      %p98 = por %p96, %p97
      %s99 = ssub.s32 %s18, %s30
      %p100 = scmp.eq.s32.totalorder %s99, 0
      %s102 = sadd.s32 %s101, 1
      %s103 = scalar_select %p100, %s101, %s102
      %p106 = pneg %p100
      %p107 = scmp.eq.s32.totalorder %s11, 3
      %p108 = por %p106, %p107
      %p109 = scmp.ne.s32.totalorder %s101, %s104
      %p110 = scmp.eq.s32.totalorder %s11, 0
      %p111 = por %p109, %p110
      %p112 = scmp.ne.s32.totalorder %s101, %s104
      %p113 = scmp.eq.s32.totalorder %s16, 3
      %p114 = por %p112, %p113
      %p115 = scmp.ne.s32.totalorder %s104, %s105
      %p116 = scmp.eq.s32.totalorder %s16, 0
      %p117 = por %p115, %p116
      %p118 = scmp.ne.s32.totalorder %s104, %s105
      %p119 = scmp.eq.s32.totalorder %s17, 3
      %p120 = por %p118, %p119
      %p122 = scmp.ne.s32.totalorder %s105, %s121
      %p123 = scmp.eq.s32.totalorder %s17, 0
      %p124 = por %p122, %p123
      %p125 = scmp.le.s32.totalorder 1, %s11
      %p126 = scmp.lt.s32.totalorder %s11, 5
      %p127 = pnand %p125, %p126
      %p128 = pneg %p127
      // Predicated region
      $region9: #{tpu_custom_call.1} parent=5 // pred_check
        _
      $region10: #{tpu_custom_call.1} parent=5 // pred_check_branch
        %130 = sbr.rel (%p127) target = $region12
      $region11: #{tpu_custom_call.1} parent=5 // pred_region
        %s131 = ssub.s32 %s11, 1
      $region12: #{tpu_custom_call.1} parent=5 // pred_fallthru
        _
      %p132 = scmp.lt.s32.totalorder %s11, 4
      // Predicated region
      $region13: #{tpu_custom_call.1} parent=5 // pred_check
        %p133 = pneg %p132
      $region14: #{tpu_custom_call.1} parent=5 // pred_check_branch
        %135 = sbr.rel (%p133) target = $region16
      $region15: #{tpu_custom_call.1} parent=5 // pred_region
        // Predicated region
        $region17: #{tpu_custom_call.1} parent=15 // pred_check
          %p136 = pneg %p51
        $region18: #{tpu_custom_call.1} parent=15 // pred_check_branch
          %138 = sbr.rel (%p136) target = $region20
        $region19: #{tpu_custom_call.1} parent=15 // pred_region
          %s139 = smul.u32 %s18, 2
          %s140 = sadd.s32 %s139, %s19
          %p141 = scmp.lt.s32.totalorder %s140, 2
          %s142 = scalar_select %p141, %s140, 2
          %p143 = scmp.lt.s32.totalorder %s142, 2
          %s144 = scalar_select %p143, %s142, 2
          %s145 = smul.addr %s144, 8
          %s146 = scalar_lea.vmem %s0, %s145
          %s147 = smul.u32 %s18, 2
          %s148 = sadd.s32 %s147, %s19
          %p149 = scmp.lt.s32.totalorder %s148, 2
          %s150 = scalar_select %p149, %s148, 2
        $region20: #{tpu_custom_call.1} parent=15 // pred_fallthru
          _
        // Predicated region
        $region21: #{tpu_custom_call.1} parent=15 // pred_check
          %p151 = pneg %p85
        $region22: #{tpu_custom_call.1} parent=15 // pred_check_branch
          %153 = sbr.rel (%p151) target = $region24
        $region23: #{tpu_custom_call.1} parent=15 // pred_region
          %s154 = smul.u32 %s18, 2
          %s155 = sadd.s32 %s154, %s19
          %p156 = scmp.lt.s32.totalorder %s155, 2
          %s157 = scalar_select %p156, %s155, 2
          %p158 = scmp.lt.s32.totalorder %s157, 2
          %s159 = scalar_select %p158, %s157, 2
          %s160 = smul.addr %s159, 8
          %s161 = scalar_lea.vmem %s1, %s160
          %s162 = smul.u32 %s18, 2
          %s163 = sadd.s32 %s162, %s19
          %p164 = scmp.lt.s32.totalorder %s163, 2
          %s165 = scalar_select %p164, %s163, 2
        $region24: #{tpu_custom_call.1} parent=15 // pred_fallthru
          _
      $region16: #{tpu_custom_call.1} parent=5 // pred_fallthru
        _
      %p166 = scmp.le.s32.totalorder 1, %s11
      %p167 = scmp.lt.s32.totalorder %s11, 5
      %p168 = pnand %p166, %p167
      %p169 = pneg %p168
      // Predicated region
      $region25: #{tpu_custom_call.1} parent=5 // pred_check
        _
      $region26: #{tpu_custom_call.1} parent=5 // pred_check_branch
        %171 = sbr.rel (%p168) target = $region28
      $region27: #{tpu_custom_call.1} parent=5 // pred_region
        %s172 = ssub.s32 %s11, 1
        %s173 = smul.u32 %s20, 2
        %s174 = sadd.s32 %s173, %s21
        %p175 = scmp.lt.s32.totalorder %s174, 2
        %s176 = scalar_select %p175, %s174, 2
        %p177 = scmp.lt.s32.totalorder %s176, 2
        %s178 = scalar_select %p177, %s176, 2
        %s179 = smul.addr %s178, 8
        %s180 = scalar_lea.vmem %s0, %s179
        %p181 = pneg %p57
        %p182 = pneg %p54
        %s183 = smul.u32 %s20, 2
        %s184 = sadd.s32 %s183, %s21
        %p185 = scmp.lt.s32.totalorder %s184, 2
        %s186 = scalar_select %p185, %s184, 2
        %p187 = scmp.lt.s32.totalorder %s186, 2
        %s188 = scalar_select %p187, %s186, 2
        %s189 = smul.addr %s188, 8
        %s190 = scalar_lea.vmem %s1, %s189
        %p191 = pneg %p91
        %p192 = pneg %p88
        %p193 = pneg %p117
        %p194 = pneg %p114
        %s195 = sand.u32 %s104, 1
        %s196 = scalar_lea.sflag [#allocation3], %s195
        %s197 = sand.u32 %s104, 1
        %s198 = smul.addr %s197, 8
        %s199 = scalar_lea.vmem [#allocation2], %s198
        %s200 = smul.u32 %s20, 2
        %s201 = sadd.s32 %s200, %s21
        %p202 = scmp.lt.s32.totalorder %s201, 2
        %s203 = scalar_select %p202, %s201, 2
        %p204 = scmp.lt.s32.totalorder %s203, 2
        %s205 = scalar_select %p204, %s203, 2
        %s206 = smul.addr %s205, 8
        %s207 = scalar_lea.vmem %s0, %s206
        %s208 = smul.u32 %s20, 2
        %s209 = sadd.s32 %s208, %s21
        %p210 = scmp.lt.s32.totalorder %s209, 2
        %s211 = scalar_select %p210, %s209, 2
        %s212 = smul.u32 %s20, 2
        %s213 = sadd.s32 %s212, %s21
        %p214 = scmp.lt.s32.totalorder %s213, 2
        %s215 = scalar_select %p214, %s213, 2
        %p216 = scmp.lt.s32.totalorder %s215, 2
        %s217 = scalar_select %p216, %s215, 2
        %s218 = smul.addr %s217, 8
        %s219 = scalar_lea.vmem %s1, %s218
        %s220 = smul.u32 %s20, 2
        %s221 = sadd.s32 %s220, %s21
        %p222 = scmp.lt.s32.totalorder %s221, 2
        %s223 = scalar_select %p222, %s221, 2
        %p224 = scmp.eq.s32.totalorder %s21, 0
        // Predicated region
        $region29: #{tpu_custom_call.1} parent=27 // pred_check
          %p225 = pneg %p224
        $region30: #{tpu_custom_call.1} parent=27 // pred_check_branch
          %227 = sbr.rel (%p225) target = $region32
        $region31: #{tpu_custom_call.1} parent=27 // pred_region
          %228 = vst [vmem:[%s199] sm:$0xff] 0.0
        $region32: #{tpu_custom_call.1} parent=27 // pred_fallthru
          _
        %v229 = vld [vmem:[%s207] sm:$0xff]
        %v230 = vld [vmem:[%s219] sm:$0xff]
        %vm231 = vcmask 261120
        %v232 = vsel %vm231, %v229, -inf
        %233 = vmax.xlane.f32.xlu0 %v232
        %v234 = vpop.xlane.xlu0 %233
        %v235 = vsub.f32 %v229, %v234
        %v236 = vmul.f32 %v235, 1.442695
        %v237 = vpow.pop %v236
        %v238 = vsel %vm231, %v237, 0.0
        %239 = vadd.xlane.f32.xlu0 %v238
        %v240 = vpop.xlane.xlu0 %239
        %v241 = vlog2.pop %v240
        %v242 = vmul.f32 %v241, 0.6931472
        %v243 = vadd.f32 %v242, %v234
        %v244 = vlaneseq
        %v245 = vand.u32 %v244, 127
        %246 = vset.pattern.permute.xlu0 0
        %247 = vperm.xlu0 %246, %v230
        %v248 = vpop.permute.xlu0 %247
        %vm249 = vcmp.eq.s32.totalorder %v245, %v248
        %v250 = vsel %vm249, %v229, 0.0
        %v251 = vsel %vm231, %v250, 0.0
        %252 = vadd.xlane.f32.xlu0 %v251
        %v253 = vpop.xlane.xlu0 %252
        %v254 = vsub.f32 %v243, %v253
        %s255 = smul.u32 %s20, 2
        %s256 = sadd.s32 %s255, %s21
        %s257 = smul.u32 %s256, 8
        %s258 = sadd.s32 %s257, 8
        %p259 = scmp.le.s32.totalorder %s258, 20
        // Predicated region
        $region33: #{tpu_custom_call.1} parent=27 // pred_check
          %p260 = pneg %p259
        $region34: #{tpu_custom_call.1} parent=27 // pred_check_branch
          %262 = sbr.rel (%p260) target = $region36
        $region35: #{tpu_custom_call.1} parent=27 // pred_region
          %v263 = vld [vmem:[%s199] sm:$0x1]
          %vm264 = vcmask 7168
          %v265 = vsel %vm264, %v254, 0.0
          %266 = vadd.xlane.f32.xlu0 %v265
          %v267 = vpop.xlane.xlu0 %266
          %v268 = vrot.slane %v267, 4
          %v269 = vadd.f32 %v267, %v268
          %v270 = vrot.slane %v269, 2
          %v271 = vadd.f32 %v269, %v270
          %v272 = vrot.slane %v271, 1
          %v273 = vadd.f32 %v271, %v272
          %s274 = vtos %v273
          %v275 = vstv %s274
          %v276 = vadd.f32 %v263, %v275
          %vm277 = vcmask 0
          %278 = vst.msk [vmem:[%s199] sm:$0x1] %vm277, %v276
        $region36: #{tpu_custom_call.1} parent=27 // pred_fallthru
          _
        %p279 = scmp.gt.s32.totalorder %s258, 20
        // Predicated region
        $region37: #{tpu_custom_call.1} parent=27 // pred_check
          %p280 = pneg %p279
        $region38: #{tpu_custom_call.1} parent=27 // pred_check_branch
          %282 = sbr.rel (%p280) target = $region40
        $region39: #{tpu_custom_call.1} parent=27 // pred_region
          %v283 = vlaneseq
          %v284 = vshrl.u32 %v283, 7
          %v285 = vstv %s257
          %v286 = vadd.s32 %v284, %v285
          %vm287 = vcmp.lt.s32.totalorder %v286, 20
          %v288 = vsel %vm287, %v254, 0.0
          %v289 = vld [vmem:[%s199] sm:$0x1]
          %vm290 = vcmask 7168
          %v291 = vsel %vm290, %v288, 0.0
          %292 = vadd.xlane.f32.xlu0 %v291
          %v293 = vpop.xlane.xlu0 %292
          %v294 = vrot.slane %v293, 4
          %v295 = vadd.f32 %v293, %v294
          %v296 = vrot.slane %v295, 2
          %v297 = vadd.f32 %v295, %v296
          %v298 = vrot.slane %v297, 1
          %v299 = vadd.f32 %v297, %v298
          %s300 = vtos %v299
          %v301 = vstv %s300
          %v302 = vadd.f32 %v289, %v301
          %vm303 = vcmask 0
          %304 = vst.msk [vmem:[%s199] sm:$0x1] %vm303, %v302
        $region40: #{tpu_custom_call.1} parent=27 // pred_fallthru
          _
        %s305 = sand.u32 %s104, 1
        %s306 = scalar_lea.sflag [#allocation3], %s305
        %s307 = sand.u32 %s104, 1
        %s308 = smul.addr %s307, 8
        %s309 = scalar_lea.vmem [#allocation2], %s308
        // Predicated region
        $region41: #{tpu_custom_call.1} parent=27 // pred_check
          %p310 = pneg %p114
        $region42: #{tpu_custom_call.1} parent=27 // pred_check_branch
          %312 = sbr.rel (%p310) target = $region44
        $region43: #{tpu_custom_call.1} parent=27 // pred_region
          %s314 = ssub.s32 128, 128
          %315 = vsyncadd %s306, %s314
          %s316 = smul.addr %s20, 128
          %s317 = scalar_lea.hbm %s2, %s316
          %s319 = sshll.u32 %s309, 4
          %s320 = int_to_ptr.vmem [resolvable:$true] %s319
          %322 = dma.vmem_to_hbm [thread:$0]  %s320, 128, %s317, %s306
        $region44: #{tpu_custom_call.1} parent=27 // pred_fallthru
          _
      $region28: #{tpu_custom_call.1} parent=5 // pred_fallthru
        _
      %p323 = scmp.le.s32.totalorder 2, %s11
      // Predicated region
      $region45: #{tpu_custom_call.1} parent=5 // pred_check
        %p324 = pneg %p323
      $region46: #{tpu_custom_call.1} parent=5 // pred_check_branch
        %326 = sbr.rel (%p324) target = $region48
      $region47: #{tpu_custom_call.1} parent=5 // pred_region
        %s327 = ssub.s32 %s11, 2
        // Predicated region
        $region49: #{tpu_custom_call.1} parent=47 // pred_check
          %p328 = pneg %p120
        $region50: #{tpu_custom_call.1} parent=47 // pred_check_branch
          %330 = sbr.rel (%p328) target = $region52
        $region51: #{tpu_custom_call.1} parent=47 // pred_region
          %s331 = sand.u32 %s105, 1
          %s332 = scalar_lea.sflag [#allocation3], %s331
          %s333 = sand.u32 %s105, 1
          %s334 = smul.addr %s333, 8
          %s335 = scalar_lea.vmem [#allocation2], %s334
          %336 = dma.done %s332, 128
        $region52: #{tpu_custom_call.1} parent=47 // pred_fallthru
          _
      $region48: #{tpu_custom_call.1} parent=5 // pred_fallthru
        _
    $region6: #{tpu_custom_call.1} parent=1 // loop_footer
      %s15 = sadd.s32 1, %s11
    $region7: #{tpu_custom_call.1} parent=1 // loop_footer_branch
      %10 = sbr.rel target = $region3
    $region8: #{tpu_custom_call.1} parent=1 // loop_exit
      _
    %337 = vsyncpa [#allocation3], 1
    %s338 = scalar_lea.sflag [#allocation3], 1
    %339 = vsyncpa %s338, 1

</llo_original>
